<compile_context>
chip_gen: v7x
topology: tpu7x:2x2x1
jax: 0.10.0
libtpu: 0.0.40
codegen_flags: <defaults>
</compile_context>

<pallas_src>
import functools

import jax
import jax.numpy as jnp
from jax.experimental import pallas as pl
from jax.experimental.pallas import tpu as pltpu

_LANES = 128                       # vreg lane width
_SUBLANES = 8                      # vreg sublane count (row-tile granularity)
_VMEM_BUDGET = 24 * 1024 * 1024    # target working set (blocks + temps)
_VMEM_LIMIT = 48 * 1024 * 1024     # scoped VMEM limit handed to Mosaic
_MAX_CHUNK_COLS = 64 * 1024        # bound per-block reduce codegen / cast temps


def _round_up(x, m):
    return ((x + m - 1) // m) * m


# --------------------------------------------------------------------------
# Kernels
# --------------------------------------------------------------------------
def _gap_single_chunk_kernel(x_ref, o_ref, *, hw):
    """Whole H*W row per grid step: reduce, scale, cast, store. No scratch."""
    total = jnp.sum(x_ref[...].astype(jnp.float32), axis=-1, keepdims=True)
    o_ref[...] = (total * (1.0 / hw)).astype(o_ref.dtype)


def _gap_multi_chunk_kernel(x_ref, o_ref, acc_ref, *, hw):
    """Grid = (row_tiles, hw_chunks); HW is the trailing 'arbitrary' axis.

    acc_ref: (t_r, 1) float32 running sum, persisted across the HW chunks.
    """
    t_hw = x_ref.shape[1]
    k = pl.program_id(1)
    nk = pl.num_programs(1)
    last_cols = hw % t_hw          # static: valid columns of the last chunk

    @pl.when(k == 0)
    def _init():
        acc_ref[...] = jnp.zeros_like(acc_ref)

    def accumulate(view):
        acc_ref[...] += jnp.sum(view.astype(jnp.float32), axis=-1, keepdims=True)

    if last_cols == 0:
        accumulate(x_ref[...])
    else:
        @pl.when(k < nk - 1)
        def _full_chunk():                      # unmasked fast path
            accumulate(x_ref[...])

        @pl.when(k == nk - 1)
        def _ragged_last_chunk():
            # Static sub-slice: the out-of-range lanes of the ragged last
            # chunk are never read (equivalent to masking, zero VPU overhead).
            accumulate(x_ref[:, :last_cols])

    @pl.when(k == nk - 1)
    def _finalize():
        o_ref[...] = (acc_ref[...] * (1.0 / hw)).astype(o_ref.dtype)


# --------------------------------------------------------------------------
# Tiling heuristics
# --------------------------------------------------------------------------
def _split_for_megacore(t_r, rows):
    # A single tile on the "parallel" row axis leaves one v7x TensorCore idle;
    # split in two when there are enough rows.  Costs at most one extra
    # ~0.35 us grid step on single-TC v5e/v6e.
    if t_r >= rows and rows >= 2 * _SUBLANES:
        t_r = min(rows, max(_SUBLANES, _round_up(pl.cdiv(rows, 2), _SUBLANES)))
    return t_r


def _choose_tiles(rows, hw, in_isz, out_isz, budget):
    """Pick (t_r, t_hw) for the (rows, hw) = (N*C, H*W) view.

    Budgets against lane-PADDED VMEM footprints: the double-buffered input
    block, the f32 cast temp of one block, the lane-padded (t_r, 1) output
    block (double-buffered) and the f32 accumulator / reduce temp.
    """
    hw_pad = _round_up(hw, _LANES)
    min_rows = min(rows, _SUBLANES)

    # ---- single chunk: the full HW axis reduced in one grid step ----
    per_row_single = (2 * hw_pad * in_isz      # double-buffered input block
                      + hw_pad * 4             # f32 cast temp of the block
                      + 2 * _LANES * out_isz   # double-buffered padded output
                      + _LANES * 4)            # (t_r, 1) f32 reduce temp
    rows_fit = budget // per_row_single
    if hw <= _LANES or (rows_fit >= min_rows and hw <= _MAX_CHUNK_COLS):
        t_r = min(rows, max(min_rows, (rows_fit // _SUBLANES) * _SUBLANES))
        return _split_for_megacore(t_r, rows), hw

    # ---- multi-chunk: stream HW in 128-multiple chunks ----
    cols_budget = budget // (min_rows * (2 * in_isz + 4))   # dbuf + cast temp
    t_hw = (cols_budget // _LANES) * _LANES
    t_hw = max(_LANES, min(t_hw, _MAX_CHUNK_COLS, (hw // _LANES) * _LANES))
    per_row_multi = (2 * t_hw * in_isz + t_hw * 4
                     + 2 * _LANES * out_isz + 2 * _LANES * 4)
    t_r = min(rows, max(min_rows,
                        (budget // per_row_multi // _SUBLANES) * _SUBLANES))
    return _split_for_megacore(t_r, rows), t_hw


# --------------------------------------------------------------------------
# Wrapper
# --------------------------------------------------------------------------
@functools.partial(jax.jit, static_argnames=("vmem_budget",))
def _gap_single(x, vmem_budget=_VMEM_BUDGET):
    """(N, C, H, W) -> (N, C) global average pool via a tiled Pallas kernel."""
    n, c, h, w = x.shape
    rows, hw = n * c, h * w
    x2d = x.reshape(rows, hw)
    in_isz = jnp.dtype(x.dtype).itemsize
    out_isz = in_isz
    t_r, t_hw = _choose_tiles(rows, hw, in_isz, out_isz, vmem_budget)

    cost = pl.CostEstimate(flops=rows * hw, transcendentals=0,
                           bytes_accessed=rows * hw * in_isz + rows * out_isz)

    if t_hw == hw:
        # Whole-row reduction in a single grid step per row tile; no scratch.
        out = pl.pallas_call(
            functools.partial(_gap_single_chunk_kernel, hw=hw),
            out_shape=jax.ShapeDtypeStruct((rows, 1), x.dtype),
            grid_spec=pltpu.PrefetchScalarGridSpec(
                num_scalar_prefetch=0,
                grid=(pl.cdiv(rows, t_r),),
                in_specs=[pl.BlockSpec((t_r, hw), lambda r: (r, 0))],
                out_specs=pl.BlockSpec((t_r, 1), lambda r: (r, 0)),
            ),
            compiler_params=pltpu.CompilerParams(
                dimension_semantics=("parallel",),
                vmem_limit_bytes=_VMEM_LIMIT),
            cost_estimate=cost,
        )(x2d)
    else:
        # HW streamed in 128-multiple chunks; f32 accumulate across chunks.
        out = pl.pallas_call(
            functools.partial(_gap_multi_chunk_kernel, hw=hw),
            out_shape=jax.ShapeDtypeStruct((rows, 1), x.dtype),
            grid_spec=pltpu.PrefetchScalarGridSpec(
                num_scalar_prefetch=0,
                grid=(pl.cdiv(rows, t_r), pl.cdiv(hw, t_hw)),
                in_specs=[pl.BlockSpec((t_r, t_hw), lambda r, k: (r, k))],
                out_specs=pl.BlockSpec((t_r, 1), lambda r, k: (r, 0)),
                scratch_shapes=[pltpu.VMEM((t_r, 1), jnp.float32)],
            ),
            compiler_params=pltpu.CompilerParams(
                dimension_semantics=("parallel", "arbitrary"),
                vmem_limit_bytes=_VMEM_LIMIT),
            cost_estimate=cost,
        )(x2d)
    return out.reshape(n, c)


def global_average_pooling(inputs):
    """Forward pass of GlobalAveragePooling (tuple or single array input)."""
    if isinstance(inputs, tuple):
        return tuple(_gap_single(x) for x in inputs)
    elif isinstance(inputs, jnp.ndarray) or hasattr(inputs, "shape"):
        return _gap_single(inputs)
    else:
        raise TypeError("neck inputs should be tuple or jax array")


if __name__ == "__main__":
    key = jax.random.PRNGKey(0)
    k1, k2, k3, k4 = jax.random.split(key, 4)

    # single-tensor path: (N, C, H, W) = (2, 4, 16, 16); hw=256 (lane-multiple)
    x = jax.random.normal(k1, (2, 4, 16, 16), dtype=jnp.float32)
    out = jax.block_until_ready(global_average_pooling(x))
    assert out.shape == (2, 4)
    assert jnp.allclose(out, jnp.mean(x, axis=(2, 3)), atol=1e-5, rtol=1e-5)

    # tuple path (multi-stage backbone outputs); hw=64 < 128 narrow-row case
    y = jax.random.normal(k2, (2, 8, 8, 8), dtype=jnp.float32)
    outs = jax.block_until_ready(global_average_pooling((x, y)))
    assert outs[0].shape == (2, 4) and outs[1].shape == (2, 8)
    assert jnp.allclose(outs[1], jnp.mean(y, axis=(2, 3)), atol=1e-5, rtol=1e-5)

    # ragged row tiles (2 parallel row tiles, last one partial) + odd spatial
    z = jax.random.normal(k3, (2, 130, 9, 7), dtype=jnp.float32)
    out_z = jax.block_until_ready(global_average_pooling(z))
    assert out_z.shape == (2, 130)
    assert jnp.allclose(out_z, jnp.mean(z, axis=(2, 3)), atol=1e-5, rtol=1e-5)

    # bf16 input: f32 accumulation, cast only at the end
    b = jax.random.normal(k4, (2, 4, 16, 16), dtype=jnp.bfloat16)
    out_b = jax.block_until_ready(global_average_pooling(b))
    assert out_b.shape == (2, 4) and out_b.dtype == jnp.bfloat16
    assert jnp.allclose(out_b.astype(jnp.float32),
                        jnp.mean(b.astype(jnp.float32), axis=(2, 3)),
                        atol=2e-2, rtol=2e-2)

    # force the multi-chunk path + ragged (static-sliced) last HW chunk
    m = jax.random.normal(k1, (2, 4, 15, 17), dtype=jnp.float32)  # HW = 255
    out_m = jax.block_until_ready(_gap_single(m, vmem_budget=8192))
    assert out_m.shape == (2, 4)
    assert jnp.allclose(out_m, jnp.mean(m, axis=(2, 3)), atol=1e-5, rtol=1e-5)

    print("KERNEL_OK")
</pallas_src>

<mosaic_0001>
module attributes {stable_mosaic.version = 11 : i64} {
  func.func @_gap_single_chunk_kernel(%arg0: i32, %arg1: memref<8x256xf32, #tpu.memory_space<vmem>>, %arg2: memref<8x1xf32, #tpu.memory_space<vmem>>) attributes {dimension_semantics = [#tpu.dimension_semantics<parallel>], iteration_bounds = array<i64: 1>, scalar_prefetch = 0 : i64, scratch_operands = 0 : i64, tpu.core_type = #tpu.core_type<tc>, window_params = [{transform_indices = @transform_0, window_bounds = array<i64: 8, 256>}, {transform_indices = @transform_1, window_bounds = array<i64: 8, 1>}]} {
    %c0 = arith.constant 0 : index
    %c0_0 = arith.constant 0 : index
    %0 = vector.load %arg1[%c0, %c0_0] : memref<8x256xf32, #tpu.memory_space<vmem>>, vector<8x256xf32>
    %cst = arith.constant dense<0.000000e+00> : vector<8xf32>
    %1 = vector.multi_reduction <add>, %0, %cst [1] : vector<8x256xf32> to vector<8xf32>
    %2 = vector.shape_cast %1 : vector<8xf32> to vector<8x1xf32>
    %cst_1 = arith.constant 3.906250e-03 : f32
    %3 = vector.broadcast %cst_1 : f32 to vector<8x1xf32>
    %4 = arith.mulf %2, %3 : vector<8x1xf32>
    %c0_2 = arith.constant 0 : index
    %c0_3 = arith.constant 0 : index
    %5 = vector.load %arg2[%c0_2, %c0_3] : memref<8x1xf32, #tpu.memory_space<vmem>>, vector<8x1xf32>
    tpu.vector_store %arg2[%c0_2, %c0_3], %4 {strides = array<i32>} : memref<8x1xf32, #tpu.memory_space<vmem>>, vector<8x1xf32>,
    return
  }
  func.func @transform_0(%arg0: i32) -> (i32, i32) {
    %c0_i32 = arith.constant 0 : i32
    %c0_i32_0 = arith.constant 0 : i32
    return %arg0, %c0_i32 : i32, i32
  }
  func.func @transform_1(%arg0: i32) -> (i32, i32) {
    %c0_i32 = arith.constant 0 : i32
    %c0_i32_0 = arith.constant 0 : i32
    return %arg0, %c0_i32 : i32, i32
  }
}

</mosaic_0001>

<llo_original>
// kernel: _gap_single.1
$region0: #{_gap_single.1}
  #allocation0 [shape = 'u32[]', space=smem, size = 0x4, offset = 0x4, fixed_abs, tag = 'smem constant byte address 0x4 - core index']
  #allocation1 [shape = 'u32[144,128]{1,0:T(1,128)}', space=vmem, size = 0x12000, scoped, tag = 'internal scratch']
  %s0 = inlined_call_operand.vmem [shape: f32[8,256], index: 0, kind: input, shape index: {}]
  %s1 = inlined_call_operand.vmem [shape: f32[8,1], index: 1, kind: output, shape index: {}]
  %s2 = sld [smem:[#allocation0]]
  $region14: #{_gap_single.1} parent=0
    _
  %s4 = ssub.s32 1, %s2
  %s5 = scalar_select 0, %s4, %s2
  // Predicated region
  $region2: #{_gap_single.1} parent=0 // pred_check
    _
  $region3: #{_gap_single.1} parent=0 // pred_check_branch
    %7 = sbr.rel (0) target = $region5
  $region4: #{_gap_single.1} parent=0 // pred_region
    _
  $region5: #{_gap_single.1} parent=0 // pred_fallthru
    _
  %v8 = vld [vmem:[%s0] sm:$0xff]
  %v9 = vld [vmem:[%s0 + $0x8] sm:$0xff]
  %v10 = vadd.f32 %v8, %v9
  %11 = vadd.xlane.f32.xlu0 %v10
  %v12 = vpop.xlane.xlu0 %11
  %v13 = vmul.f32 %v12, 0.00390625
  %vm14 = vcmask 7168
  %15 = vst.msk [vmem:[%s1] sm:$0xff] %vm14, %v13
  // Predicated region
  $region6: #{_gap_single.1} parent=0 // pred_check
    _
  $region7: #{_gap_single.1} parent=0 // pred_check_branch
    %17 = sbr.rel (0) target = $region9
  $region8: #{_gap_single.1} parent=0 // pred_region
    _
  $region9: #{_gap_single.1} parent=0 // pred_fallthru
    _
  // Predicated region
  $region10: #{_gap_single.1} parent=0 // pred_check
    _
  $region11: #{_gap_single.1} parent=0 // pred_check_branch
    %19 = sbr.rel (0) target = $region13
  $region12: #{_gap_single.1} parent=0 // pred_region
    _
  $region13: #{_gap_single.1} parent=0 // pred_fallthru
    _

</llo_original>
